<compile_context>
chip_gen: v7x
topology: tpu7x:2x2x1
jax: 0.10.0
libtpu: 0.0.40
codegen_flags: <defaults>
</compile_context>

<pallas_src>
import functools

import jax
import jax.numpy as jnp
import numpy as np
from jax import lax
from jax.experimental import pallas as pl
from jax.experimental.pallas import tpu as pltpu  # noqa: F401  (imported per spec)


def _self_attention_kernel(h_ref, w1_ref, w2t_ref, m_ref, a_ref, *, mxu_dtype):
    # h_ref  : (S, B, H)   original PyTorch layout, no wrapper transpose
    # w1_ref : (H, Ap)     W1.weight.T zero-padded to Ap (multiple of 128 lanes)
    # w2t_ref: (K, Ap)     W2.weight zero-padded along the attention dim
    # m_ref  : (B, K, H)
    # a_ref  : (B, K, S)
    S, B, H = h_ref.shape
    K = w2t_ref.shape[0]

    h_all = h_ref[...]                                   # (S, B, H) f32
    w1 = w1_ref[...]                                     # (H, Ap)
    w2t = w2t_ref[...].astype(jnp.float32)               # (K, Ap)

    for b in range(B):                                   # static unroll (B tiny)
        h = h_all[:, b, :]                               # (S, H)

        lhs = h if mxu_dtype is None else h.astype(mxu_dtype)
        # x = tanh(h @ W1^T): the only MXU matmul; accumulate in f32.
        x = jnp.tanh(jnp.dot(lhs, w1,
                             preferred_element_type=jnp.float32))    # (S, Ap)

        if K == 1:
            # K=1 scores: broadcast-multiply + lane reduction on the VPU/XLU
            # instead of a 1-column (<1% utilized) MXU matmul.
            s = jnp.sum(x * w2t, axis=1, keepdims=True)               # (S, 1)
        else:
            s = lax.dot_general(x, w2t, (((1,), (1,)), ((), ())),
                                preferred_element_type=jnp.float32)   # (S, K)

        # softmax over the sequence axis (PyTorch dim=1 after transpose(0,1))
        s_max = jnp.max(s, axis=0, keepdims=True)
        e = jnp.exp(s - s_max)
        a = e / jnp.sum(e, axis=0, keepdims=True)                     # (S, K)

        if K == 1:
            # M = sum_s a[s] * h[s]: VPU weighted sum, no a.T, no MXU.
            m = jnp.sum(a * h, axis=0, keepdims=True)                 # (1, H)
        else:
            # Contract over seq on axis 0 of both operands (trans_a matmul);
            # never materializes a.T for the product.
            m = lax.dot_general(a, h, (((0,), (0,)), ((), ())),
                                preferred_element_type=jnp.float32)   # (K, H)

        m_ref[b] = m.astype(m_ref.dtype)
        a_ref[b] = a.T.astype(a_ref.dtype)                            # (K, S)


def self_attention(hidden, w1, w2, *, mxu_dtype=None):
    """hidden: (S, B, H) float32 in the original PyTorch layout (NOT pre-transposed).
       w1: (H, Aatt) = W1.weight.T ;  w2: (Aatt, K) = W2.weight.T
       mxu_dtype: optional narrower MXU operand dtype (e.g. jnp.bfloat16, for
                  v6e/v7x); accumulation stays f32.  Default None keeps full f32.
       returns (M, A): M (B, K, H), A (B, K, S)."""
    S, B, H = hidden.shape
    Aatt = w1.shape[1]
    K = w2.shape[1]

    # Lane-align the attention dim (100 -> 128). Zero padding is inert.
    Ap = ((Aatt + 127) // 128) * 128
    w1p = jnp.pad(w1, ((0, 0), (0, Ap - Aatt)))           # (H, Ap)
    w2t = jnp.pad(w2, ((0, Ap - Aatt), (0, 0))).T         # (K, Ap)
    if mxu_dtype is not None:
        w1p = w1p.astype(mxu_dtype)

    kernel = functools.partial(_self_attention_kernel, mxu_dtype=mxu_dtype)

    # Single invocation, no grid: the whole problem lives in VMEM, so there is
    # no per-step pipeline overhead and no double-buffering of the weights.
    # For production-scale B/S one would reintroduce a batch grid (parallel on
    # v7x's two TensorCores) and an online-softmax seq tiling sized for the
    # 64 MiB-per-TC VMEM budget; unnecessary at these shapes.
    M, A = pl.pallas_call(
        kernel,
        out_shape=(
            jax.ShapeDtypeStruct((B, K, H), hidden.dtype),
            jax.ShapeDtypeStruct((B, K, S), hidden.dtype),
        ),
    )(hidden, w1p, w2t)
    return M, A


def _reference(hidden, w1, w2):
    h = jnp.transpose(hidden, (1, 0, 2))          # (B, S, H)
    x = jnp.tanh(h @ w1)                          # (B, S, Aatt)
    s = x @ w2                                    # (B, S, K)
    a = jax.nn.softmax(s, axis=1)                 # softmax over seq
    A = jnp.transpose(a, (0, 2, 1))               # (B, K, S)
    M = A @ h                                     # (B, K, H)
    return M, A


if __name__ == "__main__":
    # Small shapes consistent with the module: seq=8, batch=2, hidden=32,
    # attention_size=100, n_attention_heads=1.
    S, B, H = 8, 2, 32
    ATT, HEADS = 100, 1

    key = jax.random.PRNGKey(0)
    k_h, k_w1, k_w2 = jax.random.split(key, 3)

    hidden = jax.random.normal(k_h, (S, B, H), dtype=jnp.float32)
    # nn.Linear(H, ATT, bias=False).weight has shape (ATT, H); we store its
    # transpose so the kernel does a plain right-multiply.
    w1 = jax.random.normal(k_w1, (H, ATT), dtype=jnp.float32) * 0.1
    w2 = jax.random.normal(k_w2, (ATT, HEADS), dtype=jnp.float32) * 0.1

    M, A = self_attention(hidden, w1, w2)
    M = jax.block_until_ready(M)
    A = jax.block_until_ready(A)

    M_ref, A_ref = _reference(hidden, w1, w2)
    np.testing.assert_allclose(np.asarray(M), np.asarray(M_ref),
                               rtol=1e-5, atol=1e-5)
    np.testing.assert_allclose(np.asarray(A), np.asarray(A_ref),
                               rtol=1e-5, atol=1e-5)

    print("KERNEL_OK")
</pallas_src>

<mosaic_0001>
module attributes {stable_mosaic.version = 11 : i64} {
  func.func @_self_attention_kernel(%arg0: memref<8x2x32xf32, #tpu.memory_space<vmem>>, %arg1: memref<32x128xf32, #tpu.memory_space<vmem>>, %arg2: memref<1x128xf32, #tpu.memory_space<vmem>>, %arg3: memref<2x1x32xf32, #tpu.memory_space<vmem>>, %arg4: memref<2x1x8xf32, #tpu.memory_space<vmem>>) attributes {dimension_semantics = [], scalar_prefetch = 0 : i64, scratch_operands = 0 : i64, tpu.core_type = #tpu.core_type<tc>} {
    %c0 = arith.constant 0 : index
    %c0_0 = arith.constant 0 : index
    %c0_1 = arith.constant 0 : index
    %0 = vector.load %arg0[%c0, %c0_0, %c0_1] : memref<8x2x32xf32, #tpu.memory_space<vmem>>, vector<8x2x32xf32>
    %c0_2 = arith.constant 0 : index
    %c0_3 = arith.constant 0 : index
    %1 = vector.load %arg1[%c0_2, %c0_3] : memref<32x128xf32, #tpu.memory_space<vmem>>, vector<32x128xf32>
    %c0_4 = arith.constant 0 : index
    %c0_5 = arith.constant 0 : index
    %2 = vector.load %arg2[%c0_4, %c0_5] : memref<1x128xf32, #tpu.memory_space<vmem>>, vector<1x128xf32>
    %3 = vector.extract_strided_slice %0 {offsets = [0, 0, 0], sizes = [8, 1, 32], strides = [1, 1, 1]} : vector<8x2x32xf32> to vector<8x1x32xf32>
    %4 = vector.shape_cast %3 : vector<8x1x32xf32> to vector<8x32xf32>
    %cst = arith.constant dense<0.000000e+00> : vector<8x128xf32>
    %5 = tpu.matmul %4, %1, %cst {dimension_numbers = #tpu.dot_dimension_numbers<[1], [0], [0], [1], [0, 0, 1, 1], [], []>} : vector<8x32xf32>, vector<32x128xf32>, vector<8x128xf32> -> vector<8x128xf32>
    %6 = math.tanh %5 : vector<8x128xf32>
    %7 = vector.broadcast %2 : vector<1x128xf32> to vector<8x128xf32>
    %8 = arith.mulf %6, %7 : vector<8x128xf32>
    %cst_6 = arith.constant dense<0.000000e+00> : vector<8xf32>
    %9 = vector.multi_reduction <add>, %8, %cst_6 [1] : vector<8x128xf32> to vector<8xf32>
    %10 = vector.shape_cast %9 : vector<8xf32> to vector<8x1xf32>
    %cst_7 = arith.constant dense<0xFF800000> : vector<1xf32>
    %11 = vector.multi_reduction <maximumf>, %10, %cst_7 [0] : vector<8x1xf32> to vector<1xf32>
    %12 = vector.shape_cast %11 : vector<1xf32> to vector<1x1xf32>
    %13 = vector.broadcast %12 : vector<1x1xf32> to vector<8x1xf32>
    %14 = arith.subf %10, %13 : vector<8x1xf32>
    %15 = math.exp %14 : vector<8x1xf32>
    %cst_8 = arith.constant dense<0.000000e+00> : vector<1xf32>
    %16 = vector.multi_reduction <add>, %15, %cst_8 [0] : vector<8x1xf32> to vector<1xf32>
    %17 = vector.shape_cast %16 : vector<1xf32> to vector<1x1xf32>
    %18 = vector.broadcast %17 : vector<1x1xf32> to vector<8x1xf32>
    %19 = arith.divf %15, %18 : vector<8x1xf32>
    %20 = vector.broadcast %19 : vector<8x1xf32> to vector<8x32xf32>
    %21 = arith.mulf %20, %4 : vector<8x32xf32>
    %cst_9 = arith.constant dense<0.000000e+00> : vector<32xf32>
    %22 = vector.multi_reduction <add>, %21, %cst_9 [0] : vector<8x32xf32> to vector<32xf32>
    %23 = vector.shape_cast %22 : vector<32xf32> to vector<1x32xf32>
    %c0_10 = arith.constant 0 : index
    %c0_11 = arith.constant 0 : index
    %c0_12 = arith.constant 0 : index
    %24 = vector.load %arg3[%c0_10, %c0_11, %c0_12] : memref<2x1x32xf32, #tpu.memory_space<vmem>>, vector<1x1x32xf32>
    %25 = vector.shape_cast %24 : vector<1x1x32xf32> to vector<1x32xf32>
    %26 = vector.shape_cast %23 : vector<1x32xf32> to vector<1x1x32xf32>
    tpu.vector_store %arg3[%c0_10, %c0_11, %c0_12], %26 {strides = array<i32>} : memref<2x1x32xf32, #tpu.memory_space<vmem>>, vector<1x1x32xf32>,
    %27 = tpu.transpose %19, [1, 0] : vector<8x1xf32> -> vector<1x8xf32>
    %c0_13 = arith.constant 0 : index
    %c0_14 = arith.constant 0 : index
    %c0_15 = arith.constant 0 : index
    %28 = vector.load %arg4[%c0_13, %c0_14, %c0_15] : memref<2x1x8xf32, #tpu.memory_space<vmem>>, vector<1x1x8xf32>
    %29 = vector.shape_cast %28 : vector<1x1x8xf32> to vector<1x8xf32>
    %30 = vector.shape_cast %27 : vector<1x8xf32> to vector<1x1x8xf32>
    tpu.vector_store %arg4[%c0_13, %c0_14, %c0_15], %30 {strides = array<i32>} : memref<2x1x8xf32, #tpu.memory_space<vmem>>, vector<1x1x8xf32>,
    %31 = vector.extract_strided_slice %0 {offsets = [0, 1, 0], sizes = [8, 1, 32], strides = [1, 1, 1]} : vector<8x2x32xf32> to vector<8x1x32xf32>
    %32 = vector.shape_cast %31 : vector<8x1x32xf32> to vector<8x32xf32>
    %cst_16 = arith.constant dense<0.000000e+00> : vector<8x128xf32>
    %33 = tpu.matmul %32, %1, %cst_16 {dimension_numbers = #tpu.dot_dimension_numbers<[1], [0], [0], [1], [0, 0, 1, 1], [], []>} : vector<8x32xf32>, vector<32x128xf32>, vector<8x128xf32> -> vector<8x128xf32>
    %34 = math.tanh %33 : vector<8x128xf32>
    %35 = vector.broadcast %2 : vector<1x128xf32> to vector<8x128xf32>
    %36 = arith.mulf %34, %35 : vector<8x128xf32>
    %cst_17 = arith.constant dense<0.000000e+00> : vector<8xf32>
    %37 = vector.multi_reduction <add>, %36, %cst_17 [1] : vector<8x128xf32> to vector<8xf32>
    %38 = vector.shape_cast %37 : vector<8xf32> to vector<8x1xf32>
    %cst_18 = arith.constant dense<0xFF800000> : vector<1xf32>
    %39 = vector.multi_reduction <maximumf>, %38, %cst_18 [0] : vector<8x1xf32> to vector<1xf32>
    %40 = vector.shape_cast %39 : vector<1xf32> to vector<1x1xf32>
    %41 = vector.broadcast %40 : vector<1x1xf32> to vector<8x1xf32>
    %42 = arith.subf %38, %41 : vector<8x1xf32>
    %43 = math.exp %42 : vector<8x1xf32>
    %cst_19 = arith.constant dense<0.000000e+00> : vector<1xf32>
    %44 = vector.multi_reduction <add>, %43, %cst_19 [0] : vector<8x1xf32> to vector<1xf32>
    %45 = vector.shape_cast %44 : vector<1xf32> to vector<1x1xf32>
    %46 = vector.broadcast %45 : vector<1x1xf32> to vector<8x1xf32>
    %47 = arith.divf %43, %46 : vector<8x1xf32>
    %48 = vector.broadcast %47 : vector<8x1xf32> to vector<8x32xf32>
    %49 = arith.mulf %48, %32 : vector<8x32xf32>
    %cst_20 = arith.constant dense<0.000000e+00> : vector<32xf32>
    %50 = vector.multi_reduction <add>, %49, %cst_20 [0] : vector<8x32xf32> to vector<32xf32>
    %51 = vector.shape_cast %50 : vector<32xf32> to vector<1x32xf32>
    %c1 = arith.constant 1 : index
    %c0_21 = arith.constant 0 : index
    %c0_22 = arith.constant 0 : index
    %52 = vector.load %arg3[%c1, %c0_21, %c0_22] : memref<2x1x32xf32, #tpu.memory_space<vmem>>, vector<1x1x32xf32>
    %53 = vector.shape_cast %52 : vector<1x1x32xf32> to vector<1x32xf32>
    %54 = vector.shape_cast %51 : vector<1x32xf32> to vector<1x1x32xf32>
    tpu.vector_store %arg3[%c1, %c0_21, %c0_22], %54 {strides = array<i32>} : memref<2x1x32xf32, #tpu.memory_space<vmem>>, vector<1x1x32xf32>,
    %55 = tpu.transpose %47, [1, 0] : vector<8x1xf32> -> vector<1x8xf32>
    %c1_23 = arith.constant 1 : index
    %c0_24 = arith.constant 0 : index
    %c0_25 = arith.constant 0 : index
    %56 = vector.load %arg4[%c1_23, %c0_24, %c0_25] : memref<2x1x8xf32, #tpu.memory_space<vmem>>, vector<1x1x8xf32>
    %57 = vector.shape_cast %56 : vector<1x1x8xf32> to vector<1x8xf32>
    %58 = vector.shape_cast %55 : vector<1x8xf32> to vector<1x1x8xf32>
    tpu.vector_store %arg4[%c1_23, %c0_24, %c0_25], %58 {strides = array<i32>} : memref<2x1x8xf32, #tpu.memory_space<vmem>>, vector<1x1x8xf32>,
    return
  }
}

</mosaic_0001>

<llo_original>
// kernel: tpu_custom_call.1
$region0: #{tpu_custom_call.1}
  #allocation0 [shape = 'u32[]', space=smem, size = 0x4, offset = 0x4, fixed_abs, tag = 'smem constant byte address 0x4 - core index']
  #allocation1 [shape = 'u32[144,128]{1,0:T(1,128)}', space=vmem, size = 0x12000, scoped, tag = 'internal scratch']
  %s0 = inlined_call_operand.hbm [shape: f32[8,2,32], index: 0, kind: input, shape index: {}]
  %s1 = inlined_call_operand.hbm [shape: f32[32,128], index: 1, kind: input, shape index: {}]
  %s2 = inlined_call_operand.vmem [shape: f32[1,128], index: 2, kind: input, shape index: {}]
  %s3 = inlined_call_operand.hbm [shape: f32[2,1,32], index: 3, kind: output, shape index: {0}]
  %s4 = inlined_call_operand.hbm [shape: f32[2,1,8], index: 4, kind: output, shape index: {1}]
  %5 = xla_tuple %s3, %s4
  %s6 = sld [smem:[#allocation0]]
  $region38: #{tpu_custom_call.1} parent=0
    _
  %s8 = ssub.s32 1, %s6
  %s9 = scalar_select 0, %s8, %s6
  $region1: #{tpu_custom_call.1} parent=0
    #allocation2 [shape = 'u8[8192]{0}', space=vmem, size = 0x2000, scoped, tag = 'input window, operand 0, single buffered']
    #allocation3 [shape = 's32[1]{0}', space=sflag, size = 0x4, scoped, tag = 'scoped memory for tpu_custom_call.1']
    #allocation4 [shape = 's32[1]{0}', space=sflag, size = 0x4, scoped, tag = 'scoped memory for tpu_custom_call.1']
    #allocation5 [shape = 'u8[16384]{0}', space=vmem, size = 0x4000, scoped, tag = 'input window, operand 1, single buffered']
    #allocation6 [shape = 's32[1]{0}', space=sflag, size = 0x4, scoped, tag = 'scoped memory for tpu_custom_call.1']
    #allocation7 [shape = 'u8[1024]{0}', space=vmem, size = 0x400, scoped, tag = 'output window, operand 0, single buffered']
    #allocation8 [shape = 'u8[1024]{0}', space=vmem, size = 0x400, scoped, tag = 'output window, operand 1, single buffered']
    #allocation9 [shape = 's32[1]{0}', space=sflag, size = 0x4, scoped, tag = 'scoped memory for tpu_custom_call.1']
    %10 = vsyncpa [#allocation3], 0
    %11 = vsyncpa [#allocation6], 0
    %12 = vsyncpa [#allocation4], 0
    %13 = vsyncpa [#allocation9], 0
    // Predicated region
    $region2: #{tpu_custom_call.1} parent=1 // pred_check
      _
    $region3: #{tpu_custom_call.1} parent=1 // pred_check_branch
      %15 = sbr.rel (0) target = $region5
    $region4: #{tpu_custom_call.1} parent=1 // pred_region
      %s17 = ssub.s32 256, 256
      %18 = vsyncadd [#allocation3], %s17
      %s19 = sshll.u32 [#allocation2], 4
      %s20 = int_to_ptr.vmem [resolvable:$true] %s19
      %25 = dma.hbm_to_vmem [thread:$0]  %s0, 256, %s20, [#allocation3], 32, 32, 2
    $region5: #{tpu_custom_call.1} parent=1 // pred_fallthru
      _
    // Predicated region
    $region6: #{tpu_custom_call.1} parent=1 // pred_check
      _
    $region7: #{tpu_custom_call.1} parent=1 // pred_check_branch
      %27 = sbr.rel (0) target = $region9
    $region8: #{tpu_custom_call.1} parent=1 // pred_region
      %s29 = ssub.s32 512, 512
      %30 = vsyncadd [#allocation6], %s29
      %s31 = sshll.u32 [#allocation5], 4
      %s32 = int_to_ptr.vmem [resolvable:$true] %s31
      %37 = dma.hbm_to_vmem [thread:$0]  %s1, 512, %s32, [#allocation6], 128, 128, 8
    $region9: #{tpu_custom_call.1} parent=1 // pred_fallthru
      _
    // Predicated region
    $region10: #{tpu_custom_call.1} parent=1 // pred_check
      _
    $region11: #{tpu_custom_call.1} parent=1 // pred_check_branch
      %39 = sbr.rel (0) target = $region13
    $region12: #{tpu_custom_call.1} parent=1 // pred_region
      _
    $region13: #{tpu_custom_call.1} parent=1 // pred_fallthru
      _
    // Predicated region
    $region14: #{tpu_custom_call.1} parent=1 // pred_check
      _
    $region15: #{tpu_custom_call.1} parent=1 // pred_check_branch
      %41 = sbr.rel (0) target = $region17
    $region16: #{tpu_custom_call.1} parent=1 // pred_region
      %42 = dma.done [#allocation3], 256
    $region17: #{tpu_custom_call.1} parent=1 // pred_fallthru
      _
    // Predicated region
    $region18: #{tpu_custom_call.1} parent=1 // pred_check
      _
    $region19: #{tpu_custom_call.1} parent=1 // pred_check_branch
      %44 = sbr.rel (0) target = $region21
    $region20: #{tpu_custom_call.1} parent=1 // pred_region
      %45 = dma.done [#allocation6], 512
    $region21: #{tpu_custom_call.1} parent=1 // pred_fallthru
      _
    %v46 = vld [vmem:[#allocation2] sm:$0x3]
    %v47 = vld [vmem:[#allocation2 + $0x2] sm:$0x3]
    %v48 = vld [vmem:[#allocation2 + $0x4] sm:$0x3]
    %v49 = vld [vmem:[#allocation2 + $0x6] sm:$0x3]
    %v50 = vld [vmem:[#allocation2 + $0x8] sm:$0x3]
    %v51 = vld [vmem:[#allocation2 + $0xa] sm:$0x3]
    %v52 = vld [vmem:[#allocation2 + $0xc] sm:$0x3]
    %v53 = vld [vmem:[#allocation2 + $0xe] sm:$0x3]
    %v54 = vld [vmem:[#allocation5] sm:$0xff]
    %v55 = vld [vmem:[#allocation5 + $0x8] sm:$0xff]
    %v56 = vld [vmem:[#allocation5 + $0x10] sm:$0xff]
    %v57 = vld [vmem:[#allocation5 + $0x18] sm:$0xff]
    %v58 = vld [vmem:[%s2] sm:$0x1]
    %v67 = vrot.slane %v47, 7
    %vm68 = vcmask 1041409
    %v69 = vsel %vm68, %v67, %v46
    %v70 = vrot.slane %v48, 6
    %vm71 = vcmask 1042434
    %v72 = vsel %vm71, %v70, %v69
    %v73 = vrot.slane %v49, 5
    %vm74 = vcmask 1043459
    %v75 = vsel %vm74, %v73, %v72
    %v76 = vrot.slane %v50, 4
    %vm77 = vcmask 1044484
    %v78 = vsel %vm77, %v76, %v75
    %v79 = vrot.slane %v51, 3
    %vm80 = vcmask 1045509
    %v81 = vsel %vm80, %v79, %v78
    %v82 = vrot.slane %v52, 2
    %vm83 = vcmask 1046534
    %v84 = vsel %vm83, %v82, %v81
    %v85 = vrot.slane %v53, 1
    %vm86 = vcmask 1047559
    %v87 = vsel %vm86, %v85, %v84
    %vm88 = vcmask 261120
    %v89 = vsel %vm88, %v87, 0
    %91 = vmatprep.subr.mxu0 0.0
    %92 = vmatpush1.msra.mxu0 %v54
    %93 = vmatprep.subr.mxu0 0.0
    %94 = vmatpush1.msra.mxu0 %v55
    %95 = vmatprep.subr.mxu0 0.0
    %96 = vmatpush1.msra.mxu0 %v56
    %97 = vmatprep.subr.mxu0 0.0
    %98 = vmatpush1.msra.mxu0 %v57
    %99 = vmatprep.subr.mxu0 0.0
    %100 = vmatpush1.msra.mxu0 0.0
    %101 = vmatprep.subr.mxu0 0.0
    %102 = vmatpush1.msra.mxu0 0.0
    %103 = vmatprep.subr.mxu0 0.0
    %104 = vmatpush1.msra.mxu0 0.0
    %105 = vmatprep.subr.mxu0 0.0
    %106 = vmatpush1.msra.mxu0 0.0
    %107 = vmatprep.subr.mxu0 0.0
    %108 = vmatpush1.msra.mxu0 0.0
    %109 = vmatprep.subr.mxu0 0.0
    %110 = vmatpush1.msra.mxu0 0.0
    %111 = vmatprep.subr.mxu0 0.0
    %112 = vmatpush1.msra.mxu0 0.0
    %113 = vmatprep.subr.mxu0 0.0
    %114 = vmatpush1.msra.mxu0 0.0
    %115 = vmatprep.subr.mxu0 0.0
    %116 = vmatpush1.msra.mxu0 0.0
    %117 = vmatprep.subr.mxu0 0.0
    %118 = vmatpush1.msra.mxu0 0.0
    %119 = vmatprep.subr.mxu0 0.0
    %120 = vmatpush1.msra.mxu0 0.0
    %121 = vmatprep.subr.mxu0 0.0
    %122 = vmatpush1.msra.mxu0 0.0
    %123 = vmatprep.subr.mxu0 0.0
    %124 = vmatpush1.msra.mxu0 0.0
    %125 = vmatprep.subr.mxu0 0.0
    %126 = vmatpush1.msra.mxu0 0.0
    %127 = vmatprep.subr.mxu0 0.0
    %128 = vmatpush1.msra.mxu0 0.0
    %129 = vmatprep.subr.mxu0 0.0
    %130 = vmatpush1.msra.mxu0 0.0
    %131 = vmatprep.subr.mxu0 0.0
    %132 = vmatpush1.msra.mxu0 0.0
    %133 = vmatprep.subr.mxu0 0.0
    %134 = vmatpush1.msra.mxu0 0.0
    %135 = vmatprep.subr.mxu0 0.0
    %136 = vmatpush1.msra.mxu0 0.0
    %137 = vmatprep.subr.mxu0 0.0
    %138 = vmatpush1.msra.mxu0 0.0
    %139 = vmatprep.subr.mxu0 0.0
    %140 = vmatpush1.msra.mxu0 0.0
    %141 = vmatprep.subr.mxu0 0.0
    %142 = vmatpush1.msra.mxu0 0.0
    %143 = vmatprep.subr.mxu0 0.0
    %144 = vmatpush1.msra.mxu0 0.0
    %145 = vmatprep.subr.mxu0 0.0
    %146 = vmatpush1.msra.mxu0 0.0
    %147 = vmatprep.subr.mxu0 0.0
    %148 = vmatpush1.msra.mxu0 0.0
    %149 = vmatprep.subr.mxu0 0.0
    %150 = vmatpush1.msra.mxu0 0.0
    %151 = vmatprep.subr.mxu0 0.0
    %152 = vmatpush1.msra.mxu0 0.0
    %153 = vmatprep.subr.mxu0 0.0
    %154 = vmatpush1.msra.mxu0 0.0
    %155 = vmatprep.mubr.f32.mxu0 0.0
    %156 = vmatmul.mubr.f32.gmra.mrb[0].mxu0 %v89
    %v157 = vpop.f32.mrb[0].mxu0
    %v158 = vadd.f32 0.0, %v157
    %v159 = vpop.f32.mrb[0].mxu0
    %160 = vdwg.mxu0
    %v161 = vtanh.pop %v158
    %v163 = vlaneseq
    %v164 = vshrl.u32 %v163, 7
    %v165 = vsub.s32 0, %v164
    %v166 = vrot.slane %v58, %v165
    %v168 = vmul.f32 %v161, %v166
    %169 = vadd.xlane.f32.xlu0 %v168
    %v170 = vpop.xlane.xlu0 %169
    %v171 = vrot.slane %v170, 4
    %v172 = vmax.f32 %v170, %v171
    %v173 = vrot.slane %v172, 2
    %v174 = vmax.f32 %v172, %v173
    %v175 = vrot.slane %v174, 1
    %v176 = vmax.f32 %v174, %v175
    %v177 = vsub.f32 %v170, %v176
    %v178 = vmul.f32 %v177, 1.442695
    %v179 = vpow.pop %v178
    %v180 = vrot.slane %v179, 4
    %v181 = vadd.f32 %v179, %v180
    %v182 = vrot.slane %v181, 2
    %v183 = vadd.f32 %v181, %v182
    %v184 = vrot.slane %v183, 1
    %v185 = vadd.f32 %v183, %v184
    %v186 = vrcp.pop %v185
    %v187 = vmul.f32 %v179, %v186
    %v189 = vmul.f32 %v187, %v87
    %v190 = vsel %vm88, %v189, 0.0
    %v191 = vrot.slane %v190, 4
    %v192 = vadd.f32 %v190, %v191
    %v193 = vrot.slane %v192, 2
    %v194 = vadd.f32 %v192, %v193
    %v195 = vrot.slane %v194, 1
    %v196 = vadd.f32 %v194, %v195
    %vm197 = vcmask 253952
    %198 = vst.msk [vmem:[#allocation7] sm:$0x1] %vm197, %v196
    %199 = vxpose.xlu0.b32.start [1/16] %v187, 128
    %200 = vxpose.xlu0.b32.cont [2/16] 0.0, 128
    %201 = vxpose.xlu0.b32.cont [3/16] 0.0, 128
    %202 = vxpose.xlu0.b32.cont [4/16] 0.0, 128
    %203 = vxpose.xlu0.b32.cont [5/16] 0.0, 128
    %204 = vxpose.xlu0.b32.cont [6/16] 0.0, 128
    %205 = vxpose.xlu0.b32.cont [7/16] 0.0, 128
    %206 = vxpose.xlu0.b32.cont [8/16] 0.0, 128
    %207 = vxpose.xlu0.b32.cont [9/16] 0.0, 128
    %208 = vxpose.xlu0.b32.cont [10/16] 0.0, 128
    %209 = vxpose.xlu0.b32.cont [11/16] 0.0, 128
    %210 = vxpose.xlu0.b32.cont [12/16] 0.0, 128
    %211 = vxpose.xlu0.b32.cont [13/16] 0.0, 128
    %212 = vxpose.xlu0.b32.cont [14/16] 0.0, 128
    %213 = vxpose.xlu0.b32.cont [15/16] 0.0, 128
    %214 = vxpose.xlu0.b32.end [16/16] 0.0, 128
    %v215 = vpop.trf.xlu0
    %v216 = vpop.trf.xlu0
    %v217 = vpop.trf.xlu0
    %v218 = vpop.trf.xlu0
    %v219 = vpop.trf.xlu0
    %v220 = vpop.trf.xlu0
    %v221 = vpop.trf.xlu0
    %v222 = vpop.trf.xlu0
    %v223 = vpop.trf.xlu0
    %v224 = vpop.trf.xlu0
    %v225 = vpop.trf.xlu0
    %v226 = vpop.trf.xlu0
    %v227 = vpop.trf.xlu0
    %v228 = vpop.trf.xlu0
    %v229 = vpop.trf.xlu0
    %v230 = vpop.trf.xlu0
    %vm231 = vcmask 57344
    %232 = vst.msk [vmem:[#allocation8] sm:$0x1] %vm231, %v215
    %v233 = vrot.slane %v46, 1
    %v234 = vsel %vm68, %v47, %v233
    %v235 = vrot.slane %v48, 7
    %v236 = vsel %vm71, %v235, %v234
    %v237 = vrot.slane %v49, 6
    %v238 = vsel %vm74, %v237, %v236
    %v239 = vrot.slane %v50, 5
    %v240 = vsel %vm77, %v239, %v238
    %v241 = vrot.slane %v51, 4
    %v242 = vsel %vm80, %v241, %v240
    %v243 = vrot.slane %v52, 3
    %v244 = vsel %vm83, %v243, %v242
    %v245 = vrot.slane %v53, 2
    %v246 = vsel %vm86, %v245, %v244
    %v247 = vsel %vm88, %v246, 0
    %249 = vmatprep.subr.mxu0 0.0
    %250 = vmatpush1.msra.mxu0 %v54
    %251 = vmatprep.subr.mxu0 0.0
    %252 = vmatpush1.msra.mxu0 %v55
    %253 = vmatprep.subr.mxu0 0.0
    %254 = vmatpush1.msra.mxu0 %v56
    %255 = vmatprep.subr.mxu0 0.0
    %256 = vmatpush1.msra.mxu0 %v57
    %257 = vmatprep.subr.mxu0 0.0
    %258 = vmatpush1.msra.mxu0 0.0
    %259 = vmatprep.subr.mxu0 0.0
    %260 = vmatpush1.msra.mxu0 0.0
    %261 = vmatprep.subr.mxu0 0.0
    %262 = vmatpush1.msra.mxu0 0.0
    %263 = vmatprep.subr.mxu0 0.0
    %264 = vmatpush1.msra.mxu0 0.0
    %265 = vmatprep.subr.mxu0 0.0
    %266 = vmatpush1.msra.mxu0 0.0
    %267 = vmatprep.subr.mxu0 0.0
    %268 = vmatpush1.msra.mxu0 0.0
    %269 = vmatprep.subr.mxu0 0.0
    %270 = vmatpush1.msra.mxu0 0.0
    %271 = vmatprep.subr.mxu0 0.0
    %272 = vmatpush1.msra.mxu0 0.0
    %273 = vmatprep.subr.mxu0 0.0
    %274 = vmatpush1.msra.mxu0 0.0
    %275 = vmatprep.subr.mxu0 0.0
    %276 = vmatpush1.msra.mxu0 0.0
    %277 = vmatprep.subr.mxu0 0.0
    %278 = vmatpush1.msra.mxu0 0.0
    %279 = vmatprep.subr.mxu0 0.0
    %280 = vmatpush1.msra.mxu0 0.0
    %281 = vmatprep.subr.mxu0 0.0
    %282 = vmatpush1.msra.mxu0 0.0
    %283 = vmatprep.subr.mxu0 0.0
    %284 = vmatpush1.msra.mxu0 0.0
    %285 = vmatprep.subr.mxu0 0.0
    %286 = vmatpush1.msra.mxu0 0.0
    %287 = vmatprep.subr.mxu0 0.0
    %288 = vmatpush1.msra.mxu0 0.0
    %289 = vmatprep.subr.mxu0 0.0
    %290 = vmatpush1.msra.mxu0 0.0
    %291 = vmatprep.subr.mxu0 0.0
    %292 = vmatpush1.msra.mxu0 0.0
    %293 = vmatprep.subr.mxu0 0.0
    %294 = vmatpush1.msra.mxu0 0.0
    %295 = vmatprep.subr.mxu0 0.0
    %296 = vmatpush1.msra.mxu0 0.0
    %297 = vmatprep.subr.mxu0 0.0
    %298 = vmatpush1.msra.mxu0 0.0
    %299 = vmatprep.subr.mxu0 0.0
    %300 = vmatpush1.msra.mxu0 0.0
    %301 = vmatprep.subr.mxu0 0.0
    %302 = vmatpush1.msra.mxu0 0.0
    %303 = vmatprep.subr.mxu0 0.0
    %304 = vmatpush1.msra.mxu0 0.0
    %305 = vmatprep.subr.mxu0 0.0
    %306 = vmatpush1.msra.mxu0 0.0
    %307 = vmatprep.subr.mxu0 0.0
    %308 = vmatpush1.msra.mxu0 0.0
    %309 = vmatprep.subr.mxu0 0.0
    %310 = vmatpush1.msra.mxu0 0.0
    %311 = vmatprep.subr.mxu0 0.0
    %312 = vmatpush1.msra.mxu0 0.0
    %313 = vmatprep.mubr.f32.mxu0 0.0
    %314 = vmatmul.mubr.f32.gmra.mrb[0].mxu0 %v247
    %v315 = vpop.f32.mrb[0].mxu0
    %v316 = vadd.f32 0.0, %v315
    %v317 = vpop.f32.mrb[0].mxu0
    %318 = vdwg.mxu0
    %v319 = vtanh.pop %v316
    %v320 = vmul.f32 %v319, %v166
    %321 = vadd.xlane.f32.xlu0 %v320
    %v322 = vpop.xlane.xlu0 %321
    %v323 = vrot.slane %v322, 4
    %v324 = vmax.f32 %v322, %v323
    %v325 = vrot.slane %v324, 2
    %v326 = vmax.f32 %v324, %v325
    %v327 = vrot.slane %v326, 1
    %v328 = vmax.f32 %v326, %v327
    %v329 = vsub.f32 %v322, %v328
    %v330 = vmul.f32 %v329, 1.442695
    %v331 = vpow.pop %v330
    %v332 = vrot.slane %v331, 4
    %v333 = vadd.f32 %v331, %v332
    %v334 = vrot.slane %v333, 2
    %v335 = vadd.f32 %v333, %v334
    %v336 = vrot.slane %v335, 1
    %v337 = vadd.f32 %v335, %v336
    %v338 = vrcp.pop %v337
    %v339 = vmul.f32 %v331, %v338
    %v341 = vmul.f32 %v339, %v246
    %v342 = vsel %vm88, %v341, 0.0
    %v343 = vrot.slane %v342, 4
    %v344 = vadd.f32 %v342, %v343
    %v345 = vrot.slane %v344, 2
    %v346 = vadd.f32 %v344, %v345
    %v347 = vrot.slane %v346, 1
    %v348 = vadd.f32 %v346, %v347
    %s349 = scalar_lea.vmem [#allocation7], 1
    %350 = vst.msk [vmem:[%s349] sm:$0x1] %vm197, %v348
    %351 = vxpose.xlu0.b32.start [1/16] %v339, 128
    %352 = vxpose.xlu0.b32.cont [2/16] 0.0, 128
    %353 = vxpose.xlu0.b32.cont [3/16] 0.0, 128
    %354 = vxpose.xlu0.b32.cont [4/16] 0.0, 128
    %355 = vxpose.xlu0.b32.cont [5/16] 0.0, 128
    %356 = vxpose.xlu0.b32.cont [6/16] 0.0, 128
    %357 = vxpose.xlu0.b32.cont [7/16] 0.0, 128
    %358 = vxpose.xlu0.b32.cont [8/16] 0.0, 128
    %359 = vxpose.xlu0.b32.cont [9/16] 0.0, 128
    %360 = vxpose.xlu0.b32.cont [10/16] 0.0, 128
    %361 = vxpose.xlu0.b32.cont [11/16] 0.0, 128
    %362 = vxpose.xlu0.b32.cont [12/16] 0.0, 128
    %363 = vxpose.xlu0.b32.cont [13/16] 0.0, 128
    %364 = vxpose.xlu0.b32.cont [14/16] 0.0, 128
    %365 = vxpose.xlu0.b32.cont [15/16] 0.0, 128
    %366 = vxpose.xlu0.b32.end [16/16] 0.0, 128
    %v367 = vpop.trf.xlu0
    %v368 = vpop.trf.xlu0
    %v369 = vpop.trf.xlu0
    %v370 = vpop.trf.xlu0
    %v371 = vpop.trf.xlu0
    %v372 = vpop.trf.xlu0
    %v373 = vpop.trf.xlu0
    %v374 = vpop.trf.xlu0
    %v375 = vpop.trf.xlu0
    %v376 = vpop.trf.xlu0
    %v377 = vpop.trf.xlu0
    %v378 = vpop.trf.xlu0
    %v379 = vpop.trf.xlu0
    %v380 = vpop.trf.xlu0
    %v381 = vpop.trf.xlu0
    %v382 = vpop.trf.xlu0
    %s383 = scalar_lea.vmem [#allocation8], 1
    %384 = vst.msk [vmem:[%s383] sm:$0x1] %vm231, %v367
    // Predicated region
    $region22: #{tpu_custom_call.1} parent=1 // pred_check
      _
    $region23: #{tpu_custom_call.1} parent=1 // pred_check_branch
      %386 = sbr.rel (0) target = $region25
    $region24: #{tpu_custom_call.1} parent=1 // pred_region
      %s388 = ssub.s32 32, 32
      %389 = vsyncadd [#allocation4], %s388
      %s390 = sshll.u32 [#allocation7], 4
      %s391 = int_to_ptr.vmem [resolvable:$true] %s390
      %396 = dma.vmem_to_hbm [thread:$0]  %s391, 32, %s3, [#allocation4], 16, 16, 1
    $region25: #{tpu_custom_call.1} parent=1 // pred_fallthru
      _
    // Predicated region
    $region26: #{tpu_custom_call.1} parent=1 // pred_check
      _
    $region27: #{tpu_custom_call.1} parent=1 // pred_check_branch
      %398 = sbr.rel (0) target = $region29
    $region28: #{tpu_custom_call.1} parent=1 // pred_region
      %s400 = ssub.s32 32, 32
      %401 = vsyncadd [#allocation9], %s400
      %s402 = sshll.u32 [#allocation8], 4
      %s403 = int_to_ptr.vmem [resolvable:$true] %s402
      %408 = dma.vmem_to_hbm [thread:$0]  %s403, 32, %s4, [#allocation9], 16, 16, 1
    $region29: #{tpu_custom_call.1} parent=1 // pred_fallthru
      _
    // Predicated region
    $region30: #{tpu_custom_call.1} parent=1 // pred_check
      _
    $region31: #{tpu_custom_call.1} parent=1 // pred_check_branch
      %410 = sbr.rel (0) target = $region33
    $region32: #{tpu_custom_call.1} parent=1 // pred_region
      %411 = dma.done [#allocation4], 32
    $region33: #{tpu_custom_call.1} parent=1 // pred_fallthru
      _
    // Predicated region
    $region34: #{tpu_custom_call.1} parent=1 // pred_check
      _
    $region35: #{tpu_custom_call.1} parent=1 // pred_check_branch
      %413 = sbr.rel (0) target = $region37
    $region36: #{tpu_custom_call.1} parent=1 // pred_region
      %414 = dma.done [#allocation9], 32
    $region37: #{tpu_custom_call.1} parent=1 // pred_fallthru
      _
    %415 = vsyncpa [#allocation3], 1
    %416 = vsyncpa [#allocation6], 1
    %417 = vsyncpa [#allocation4], 1
    %418 = vsyncpa [#allocation9], 1

</llo_original>
